<compile_context>
chip_gen: v5e
topology: v5e:2x2
jax: 0.10.0
libtpu: 0.0.40
codegen_flags: <defaults>
</compile_context>

<pallas_src>
import jax
import jax.numpy as jnp
from jax.experimental import pallas as pl
from jax.experimental.pallas import tpu as pltpu


def _round_up(n: int, m: int) -> int:
    return ((n + m - 1) // m) * m


def rbf_mlp_kernel(x_ref, wbc_ref, wbeta_ref, w1_ref, b1_ref, w2_ref, b2_ref,
                   out_ref):
    # Batch-in-lanes layout: the batch is the last (lane) axis everywhere.
    xa = x_ref[...]                                                  # (J+1, TB), last row == 1

    # z^T[i,b] = sum_j beta_j (c_ij - x_bj)^2, expanded; constant term rides on
    # the appended ones-row, so z is just two resident-weight MXU matmuls.
    z = (jnp.dot(wbc_ref[...], xa, preferred_element_type=jnp.float32)
         + jnp.dot(wbeta_ref[...], xa * xa,
                   preferred_element_type=jnp.float32))              # (I, TB)
    g = jnp.exp(-z)                                                  # EUP, lane-dense

    h = jnp.maximum(
        jnp.dot(w1_ref[...], g, preferred_element_type=jnp.float32)
        + b1_ref[...], 0.0)                                          # (H, TB)
    out_ref[...] = (
        jnp.dot(w2_ref[...], h, preferred_element_type=jnp.float32)
        + b2_ref[...])                                               # (O, TB), lane-dense store


def rbf_forward(x, c, beta, w1, b1, w2, b2, *, block_b=4096):
    """x: (B, 1, in_size-1)   (matches the PyTorch broadcast against c).

    Weights are in PyTorch nn.Linear layout:
      w1: (hidden, in_size), b1: (hidden,), w2: (out, hidden), b2: (out,)
    """
    B = x.shape[0]
    xb = x.reshape(B, -1).astype(jnp.float32)                        # (B, J)
    J = xb.shape[1]
    I = c.shape[0]
    H = w1.shape[0]
    O = w2.shape[0]

    # ---- parameter-only precomputation (hoisted out of the kernel) ----
    bc = (-2.0 * beta[None, :] * c).astype(jnp.float32)              # (I, J)
    cterm = jnp.sum(beta[None, :] * c * c, axis=1,
                    keepdims=True).astype(jnp.float32)               # (I, 1)
    wbc = jnp.concatenate([bc, cterm], axis=1)                       # (I, J+1)
    wbeta = jnp.concatenate(
        [jnp.broadcast_to(beta[None, :], (I, J)).astype(jnp.float32),
         jnp.zeros((I, 1), jnp.float32)], axis=1)                    # (I, J+1)

    # ---- batch tiling: batch lives on the lane axis -> tiles are k*128 ----
    b_ceil = _round_up(B, 128)
    tb = min(block_b, b_ceil)
    if b_ceil > 128:
        # guarantee >=2 grid steps so v7x can spread the batch over both TCs
        tb = min(tb, _round_up(-(-b_ceil // 2), 128))
    b_pad = _round_up(b_ceil, tb)

    # x^T with an appended ones row (carries the constant sum_j beta_j c_ij^2).
    xt = jnp.concatenate([xb.T, jnp.ones((1, B), jnp.float32)], axis=0)  # (J+1, B)
    if b_pad != B:
        xt = jnp.pad(xt, ((0, 0), (0, b_pad - B)))

    grid = (b_pad // tb,)
    out_t = pl.pallas_call(
        rbf_mlp_kernel,
        out_shape=jax.ShapeDtypeStruct((O, b_pad), jnp.float32),
        grid_spec=pltpu.PrefetchScalarGridSpec(
            num_scalar_prefetch=0,
            grid=grid,
            in_specs=[
                pl.BlockSpec((J + 1, tb), lambda i: (0, i)),   # x^T tile (lane-dense rows)
                pl.BlockSpec((I, J + 1), lambda i: (0, 0)),    # wbc   (resident)
                pl.BlockSpec((I, J + 1), lambda i: (0, 0)),    # wbeta (resident)
                pl.BlockSpec((H, I), lambda i: (0, 0)),        # W1
                pl.BlockSpec((H, 1), lambda i: (0, 0)),        # b1
                pl.BlockSpec((O, H), lambda i: (0, 0)),        # W2
                pl.BlockSpec((O, 1), lambda i: (0, 0)),        # b2
            ],
            out_specs=pl.BlockSpec((O, tb), lambda i: (0, i)),
        ),
        compiler_params=pltpu.CompilerParams(
            dimension_semantics=("parallel",),   # batch tiles independent -> megacore
        ),
    )(xt, wbc, wbeta,
      w1.astype(jnp.float32), b1.reshape(-1, 1).astype(jnp.float32),
      w2.astype(jnp.float32), b2.reshape(-1, 1).astype(jnp.float32))

    # (O, b_pad) -> (B, O): trims only padded batch columns (~16 B/sample),
    # instead of slicing a 128-lane-padded array.
    return out_t[:, :B].T


def _reference(x, c, beta, w1, b1, w2, b2):
    # Pure-JAX mirror of the PyTorch forward (nn.Linear convention).
    d = (c[None, :, :] - x) ** 2                        # (B, I, J)
    g = jnp.exp(-jnp.einsum("bij,j->bi", d, beta))      # (B, I)
    h = jnp.maximum(g @ w1.T + b1, 0.0)                 # (B, H)
    return h @ w2.T + b2                                # (B, O)


if __name__ == "__main__":
    in_size, hidden_size, out_size = 16, 8, 4
    J = in_size - 1

    key = jax.random.PRNGKey(0)
    k1, k2, k3, k4, kx1, kx2 = jax.random.split(key, 6)

    # Parameters: c and beta are ones exactly as in Model.__init__; linear
    # layers deterministic, stored in PyTorch (out_features, in_features) layout.
    c = jnp.ones((in_size, J), jnp.float32)
    beta = jnp.ones((J,), jnp.float32)
    w1 = jax.random.normal(k1, (hidden_size, in_size), jnp.float32) * 0.1
    b1 = jax.random.normal(k2, (hidden_size,), jnp.float32) * 0.1
    w2 = jax.random.normal(k3, (out_size, hidden_size), jnp.float32) * 0.1
    b2 = jax.random.normal(k4, (out_size,), jnp.float32) * 0.1

    # Test 1: small batch (single grid step).
    B1 = 8
    x1 = 1.0 + 0.25 * jax.random.normal(kx1, (B1, 1, J), jnp.float32)
    out1 = jax.block_until_ready(rbf_forward(x1, c, beta, w1, b1, w2, b2))
    ref1 = _reference(x1, c, beta, w1, b1, w2, b2)
    assert out1.shape == (B1, out_size)
    assert jnp.allclose(out1, ref1, atol=1e-4, rtol=1e-4), "mismatch (B=8)"

    # Test 2: batch large enough for a multi-step (parallel) grid + padding.
    B2 = 300
    x2 = 1.0 + 0.25 * jax.random.normal(kx2, (B2, 1, J), jnp.float32)
    out2 = jax.block_until_ready(rbf_forward(x2, c, beta, w1, b1, w2, b2))
    ref2 = _reference(x2, c, beta, w1, b1, w2, b2)
    assert out2.shape == (B2, out_size)
    assert jnp.allclose(out2, ref2, atol=1e-4, rtol=1e-4), "mismatch (B=300)"

    print("KERNEL_OK")
</pallas_src>

<mosaic_0001>
module attributes {stable_mosaic.version = 11 : i64} {
  func.func @rbf_mlp_kernel(%arg0: i32, %arg1: memref<16x128xf32, #tpu.memory_space<vmem>>, %arg2: memref<16x16xf32, #tpu.memory_space<vmem>>, %arg3: memref<16x16xf32, #tpu.memory_space<vmem>>, %arg4: memref<8x16xf32, #tpu.memory_space<vmem>>, %arg5: memref<8x1xf32, #tpu.memory_space<vmem>>, %arg6: memref<4x8xf32, #tpu.memory_space<vmem>>, %arg7: memref<4x1xf32, #tpu.memory_space<vmem>>, %arg8: memref<4x128xf32, #tpu.memory_space<vmem>>) attributes {dimension_semantics = [#tpu.dimension_semantics<parallel>], iteration_bounds = array<i64: 1>, scalar_prefetch = 0 : i64, scratch_operands = 0 : i64, tpu.core_type = #tpu.core_type<tc>, window_params = [{transform_indices = @transform_0, window_bounds = array<i64: 16, 128>}, {pipeline_mode = #tpu.pipeline_mode<synchronous>, transform_indices = @transform_1, window_bounds = array<i64: 16, 16>}, {pipeline_mode = #tpu.pipeline_mode<synchronous>, transform_indices = @transform_2, window_bounds = array<i64: 16, 16>}, {pipeline_mode = #tpu.pipeline_mode<synchronous>, transform_indices = @transform_3, window_bounds = array<i64: 8, 16>}, {pipeline_mode = #tpu.pipeline_mode<synchronous>, transform_indices = @transform_4, window_bounds = array<i64: 8, 1>}, {pipeline_mode = #tpu.pipeline_mode<synchronous>, transform_indices = @transform_5, window_bounds = array<i64: 4, 8>}, {pipeline_mode = #tpu.pipeline_mode<synchronous>, transform_indices = @transform_6, window_bounds = array<i64: 4, 1>}, {transform_indices = @transform_7, window_bounds = array<i64: 4, 128>}]} {
    %c0 = arith.constant 0 : index
    %c0_0 = arith.constant 0 : index
    %0 = vector.load %arg1[%c0, %c0_0] : memref<16x128xf32, #tpu.memory_space<vmem>>, vector<16x128xf32>
    %c0_1 = arith.constant 0 : index
    %c0_2 = arith.constant 0 : index
    %1 = vector.load %arg2[%c0_1, %c0_2] : memref<16x16xf32, #tpu.memory_space<vmem>>, vector<16x16xf32>
    %cst = arith.constant dense<0.000000e+00> : vector<16x128xf32>
    %2 = tpu.matmul %1, %0, %cst {dimension_numbers = #tpu.dot_dimension_numbers<[1], [0], [0], [1], [0, 0, 1, 1], [], []>} : vector<16x16xf32>, vector<16x128xf32>, vector<16x128xf32> -> vector<16x128xf32>
    %c0_3 = arith.constant 0 : index
    %c0_4 = arith.constant 0 : index
    %3 = vector.load %arg3[%c0_3, %c0_4] : memref<16x16xf32, #tpu.memory_space<vmem>>, vector<16x16xf32>
    %4 = arith.mulf %0, %0 : vector<16x128xf32>
    %cst_5 = arith.constant dense<0.000000e+00> : vector<16x128xf32>
    %5 = tpu.matmul %3, %4, %cst_5 {dimension_numbers = #tpu.dot_dimension_numbers<[1], [0], [0], [1], [0, 0, 1, 1], [], []>} : vector<16x16xf32>, vector<16x128xf32>, vector<16x128xf32> -> vector<16x128xf32>
    %6 = arith.addf %2, %5 : vector<16x128xf32>
    %cst_6 = arith.constant 0.000000e+00 : f32
    %7 = vector.broadcast %cst_6 : f32 to vector<16x128xf32>
    %8 = arith.subf %7, %6 : vector<16x128xf32>
    %9 = math.exp %8 : vector<16x128xf32>
    %c0_7 = arith.constant 0 : index
    %c0_8 = arith.constant 0 : index
    %10 = vector.load %arg4[%c0_7, %c0_8] : memref<8x16xf32, #tpu.memory_space<vmem>>, vector<8x16xf32>
    %cst_9 = arith.constant dense<0.000000e+00> : vector<8x128xf32>
    %11 = tpu.matmul %10, %9, %cst_9 {dimension_numbers = #tpu.dot_dimension_numbers<[1], [0], [0], [1], [0, 0, 1, 1], [], []>} : vector<8x16xf32>, vector<16x128xf32>, vector<8x128xf32> -> vector<8x128xf32>
    %c0_10 = arith.constant 0 : index
    %c0_11 = arith.constant 0 : index
    %12 = vector.load %arg5[%c0_10, %c0_11] : memref<8x1xf32, #tpu.memory_space<vmem>>, vector<8x1xf32>
    %13 = vector.broadcast %12 : vector<8x1xf32> to vector<8x128xf32>
    %14 = arith.addf %11, %13 : vector<8x128xf32>
    %cst_12 = arith.constant 0.000000e+00 : f32
    %15 = vector.broadcast %cst_12 : f32 to vector<8x128xf32>
    %16 = arith.maximumf %14, %15 : vector<8x128xf32>
    %c0_13 = arith.constant 0 : index
    %c0_14 = arith.constant 0 : index
    %17 = vector.load %arg6[%c0_13, %c0_14] : memref<4x8xf32, #tpu.memory_space<vmem>>, vector<4x8xf32>
    %cst_15 = arith.constant dense<0.000000e+00> : vector<4x128xf32>
    %18 = tpu.matmul %17, %16, %cst_15 {dimension_numbers = #tpu.dot_dimension_numbers<[1], [0], [0], [1], [0, 0, 1, 1], [], []>} : vector<4x8xf32>, vector<8x128xf32>, vector<4x128xf32> -> vector<4x128xf32>
    %c0_16 = arith.constant 0 : index
    %c0_17 = arith.constant 0 : index
    %19 = vector.load %arg7[%c0_16, %c0_17] : memref<4x1xf32, #tpu.memory_space<vmem>>, vector<4x1xf32>
    %20 = vector.broadcast %19 : vector<4x1xf32> to vector<4x128xf32>
    %21 = arith.addf %18, %20 : vector<4x128xf32>
    %c0_18 = arith.constant 0 : index
    %c0_19 = arith.constant 0 : index
    %22 = vector.load %arg8[%c0_18, %c0_19] : memref<4x128xf32, #tpu.memory_space<vmem>>, vector<4x128xf32>
    tpu.vector_store %arg8[%c0_18, %c0_19], %21 {strides = array<i32>} : memref<4x128xf32, #tpu.memory_space<vmem>>, vector<4x128xf32>,
    return
  }
  func.func @transform_0(%arg0: i32) -> (i32, i32) {
    %c0_i32 = arith.constant 0 : i32
    %c0_i32_0 = arith.constant 0 : i32
    return %c0_i32, %arg0 : i32, i32
  }
  func.func @transform_1(%arg0: i32) -> (i32, i32) {
    %c0_i32 = arith.constant 0 : i32
    %c0_i32_0 = arith.constant 0 : i32
    %c0_i32_1 = arith.constant 0 : i32
    return %c0_i32, %c0_i32_0 : i32, i32
  }
  func.func @transform_2(%arg0: i32) -> (i32, i32) {
    %c0_i32 = arith.constant 0 : i32
    %c0_i32_0 = arith.constant 0 : i32
    %c0_i32_1 = arith.constant 0 : i32
    return %c0_i32, %c0_i32_0 : i32, i32
  }
  func.func @transform_3(%arg0: i32) -> (i32, i32) {
    %c0_i32 = arith.constant 0 : i32
    %c0_i32_0 = arith.constant 0 : i32
    %c0_i32_1 = arith.constant 0 : i32
    return %c0_i32, %c0_i32_0 : i32, i32
  }
  func.func @transform_4(%arg0: i32) -> (i32, i32) {
    %c0_i32 = arith.constant 0 : i32
    %c0_i32_0 = arith.constant 0 : i32
    %c0_i32_1 = arith.constant 0 : i32
    return %c0_i32, %c0_i32_0 : i32, i32
  }
  func.func @transform_5(%arg0: i32) -> (i32, i32) {
    %c0_i32 = arith.constant 0 : i32
    %c0_i32_0 = arith.constant 0 : i32
    %c0_i32_1 = arith.constant 0 : i32
    return %c0_i32, %c0_i32_0 : i32, i32
  }
  func.func @transform_6(%arg0: i32) -> (i32, i32) {
    %c0_i32 = arith.constant 0 : i32
    %c0_i32_0 = arith.constant 0 : i32
    %c0_i32_1 = arith.constant 0 : i32
    return %c0_i32, %c0_i32_0 : i32, i32
  }
  func.func @transform_7(%arg0: i32) -> (i32, i32) {
    %c0_i32 = arith.constant 0 : i32
    %c0_i32_0 = arith.constant 0 : i32
    return %c0_i32, %arg0 : i32, i32
  }
}

</mosaic_0001>

<llo_original>
// kernel: tpu_custom_call.1
$region0: #{tpu_custom_call.1}
  #allocation0 [shape = 'u32[]', space=smem, size = 0x4, offset = 0x4, fixed_abs, tag = 'smem constant byte address 0x4 - core index']
  #allocation1 [shape = 'u32[72,128]{1,0:T(1,128)}', space=vmem, size = 0x9000, scoped, tag = 'internal scratch']
  %s0 = inlined_call_operand.hbm [shape: f32[16,128], index: 0, kind: input, shape index: {}]
  %s1 = inlined_call_operand.hbm [shape: f32[16,16], index: 1, kind: input, shape index: {}]
  %s2 = inlined_call_operand.hbm [shape: f32[16,16], index: 2, kind: input, shape index: {}]
  %s3 = inlined_call_operand.vmem [shape: f32[8,16], index: 3, kind: input, shape index: {}]
  %s4 = inlined_call_operand.vmem [shape: f32[8,1], index: 4, kind: input, shape index: {}]
  %s5 = inlined_call_operand.vmem [shape: f32[4,8], index: 5, kind: input, shape index: {}]
  %s6 = inlined_call_operand.vmem [shape: f32[4,1], index: 6, kind: input, shape index: {}]
  %s7 = inlined_call_operand.hbm [shape: f32[4,128], index: 7, kind: output, shape index: {}]
  %s8 = sld [smem:[#allocation0]]
  $region50: #{tpu_custom_call.1} parent=0
    _
  %s10 = ssub.s32 1, %s8
  %s11 = scalar_select 0, %s10, %s8
  $region1: #{tpu_custom_call.1} parent=0
    #allocation2 [shape = 'u8[8192]{0}', space=vmem, size = 0x2000, scoped, tag = 'input window, operand 0, single buffered']
    #allocation3 [shape = 's32[1]{0}', space=sflag, size = 0x4, scoped, tag = 'scoped memory for tpu_custom_call.1']
    #allocation4 [shape = 's32[1]{0}', space=sflag, size = 0x4, scoped, tag = 'scoped memory for tpu_custom_call.1']
    #allocation5 [shape = 'u8[8192]{0}', space=vmem, size = 0x2000, scoped, tag = 'input window, operand 1, single buffered']
    #allocation6 [shape = 's32[1]{0}', space=sflag, size = 0x4, scoped, tag = 'scoped memory for tpu_custom_call.1']
    #allocation7 [shape = 'u8[8192]{0}', space=vmem, size = 0x2000, scoped, tag = 'input window, operand 2, single buffered']
    #allocation8 [shape = 'u8[2048]{0}', space=vmem, size = 0x800, scoped, tag = 'output window, operand 0, single buffered']
    %12 = vsyncpa [#allocation3], 0
    %13 = vsyncpa [#allocation6], 0
    %14 = vsyncpa [#allocation4], 0
    // Predicated region
    $region2: #{tpu_custom_call.1} parent=1 // pred_check
      _
    $region3: #{tpu_custom_call.1} parent=1 // pred_check_branch
      %16 = sbr.rel (0) target = $region5
    $region4: #{tpu_custom_call.1} parent=1 // pred_region
      %18 = vsyncadd [#allocation3], 0
      %s19 = sshll.u32 %s0, 4
      %s20 = int_to_ptr.hbm [resolvable:$true] %s19
      %s21 = sshll.u32 [#allocation2], 4
      %s22 = int_to_ptr.vmem [resolvable:$true] %s21
      %27 = dma.hbm_to_vmem [thread:$0]  %s20, 256, %s22, [#allocation3], 128, 128, 8
    $region5: #{tpu_custom_call.1} parent=1 // pred_fallthru
      _
    // Predicated region
    $region6: #{tpu_custom_call.1} parent=1 // pred_check
      _
    $region7: #{tpu_custom_call.1} parent=1 // pred_check_branch
      %29 = sbr.rel (0) target = $region9
    $region8: #{tpu_custom_call.1} parent=1 // pred_region
      %31 = vsyncadd [#allocation6], 0
      %s32 = sshll.u32 %s1, 4
      %s33 = int_to_ptr.hbm [resolvable:$true] %s32
      %s34 = sshll.u32 [#allocation5], 4
      %s35 = int_to_ptr.vmem [resolvable:$true] %s34
      %40 = dma.hbm_to_vmem [thread:$0]  %s33, 256, %s35, [#allocation6], 128, 128, 8
    $region9: #{tpu_custom_call.1} parent=1 // pred_fallthru
      _
    // Predicated region
    $region10: #{tpu_custom_call.1} parent=1 // pred_check
      _
    $region11: #{tpu_custom_call.1} parent=1 // pred_check_branch
      %42 = sbr.rel (0) target = $region13
    $region12: #{tpu_custom_call.1} parent=1 // pred_region
      %44 = vsyncadd [#allocation6], 0
      %s45 = sshll.u32 %s2, 4
      %s46 = int_to_ptr.hbm [resolvable:$true] %s45
      %s47 = sshll.u32 [#allocation7], 4
      %s48 = int_to_ptr.vmem [resolvable:$true] %s47
      %53 = dma.hbm_to_vmem [thread:$0]  %s46, 256, %s48, [#allocation6], 128, 128, 8
    $region13: #{tpu_custom_call.1} parent=1 // pred_fallthru
      _
    // Predicated region
    $region14: #{tpu_custom_call.1} parent=1 // pred_check
      _
    $region15: #{tpu_custom_call.1} parent=1 // pred_check_branch
      %55 = sbr.rel (0) target = $region17
    $region16: #{tpu_custom_call.1} parent=1 // pred_region
      _
    $region17: #{tpu_custom_call.1} parent=1 // pred_fallthru
      _
    // Predicated region
    $region18: #{tpu_custom_call.1} parent=1 // pred_check
      _
    $region19: #{tpu_custom_call.1} parent=1 // pred_check_branch
      %57 = sbr.rel (0) target = $region21
    $region20: #{tpu_custom_call.1} parent=1 // pred_region
      _
    $region21: #{tpu_custom_call.1} parent=1 // pred_fallthru
      _
    // Predicated region
    $region22: #{tpu_custom_call.1} parent=1 // pred_check
      _
    $region23: #{tpu_custom_call.1} parent=1 // pred_check_branch
      %59 = sbr.rel (0) target = $region25
    $region24: #{tpu_custom_call.1} parent=1 // pred_region
      _
    $region25: #{tpu_custom_call.1} parent=1 // pred_fallthru
      _
    // Predicated region
    $region26: #{tpu_custom_call.1} parent=1 // pred_check
      _
    $region27: #{tpu_custom_call.1} parent=1 // pred_check_branch
      %61 = sbr.rel (0) target = $region29
    $region28: #{tpu_custom_call.1} parent=1 // pred_region
      _
    $region29: #{tpu_custom_call.1} parent=1 // pred_fallthru
      _
    // Predicated region
    $region30: #{tpu_custom_call.1} parent=1 // pred_check
      _
    $region31: #{tpu_custom_call.1} parent=1 // pred_check_branch
      %63 = sbr.rel (0) target = $region33
    $region32: #{tpu_custom_call.1} parent=1 // pred_region
      %65 = dma.done [#allocation3], 256
    $region33: #{tpu_custom_call.1} parent=1 // pred_fallthru
      _
    // Predicated region
    $region34: #{tpu_custom_call.1} parent=1 // pred_check
      _
    $region35: #{tpu_custom_call.1} parent=1 // pred_check_branch
      %67 = sbr.rel (0) target = $region37
    $region36: #{tpu_custom_call.1} parent=1 // pred_region
      %69 = dma.done [#allocation6], 256
    $region37: #{tpu_custom_call.1} parent=1 // pred_fallthru
      _
    // Predicated region
    $region38: #{tpu_custom_call.1} parent=1 // pred_check
      _
    $region39: #{tpu_custom_call.1} parent=1 // pred_check_branch
      %71 = sbr.rel (0) target = $region41
    $region40: #{tpu_custom_call.1} parent=1 // pred_region
      %73 = dma.done [#allocation6], 256
    $region41: #{tpu_custom_call.1} parent=1 // pred_fallthru
      _
    %v74 = vld [vmem:[#allocation2] sm:$0xff]
    %v75 = vld [vmem:[#allocation2 + $0x8] sm:$0xff]
    %v76 = vld [vmem:[#allocation5] sm:$0xff]
    %v77 = vld [vmem:[#allocation5 + $0x8] sm:$0xff]
    %v78 = vld [vmem:[#allocation7] sm:$0xff]
    %v79 = vld [vmem:[#allocation7 + $0x8] sm:$0xff]
    %v80 = vmul.f32 %v74, %v74
    %v81 = vmul.f32 %v75, %v75
    %vm82 = vcmask 130048
    %v84 = vsel %vm82, %v78, 0
    %v87 = vsel %vm82, %v79, 0
    %89 = vmatpush.msra.mxu0 0.0
    %90 = vmatpush.msra.mxu0 0.0
    %91 = vmatpush.msra.mxu0 0.0
    %92 = vmatpush.msra.mxu0 0.0
    %93 = vmatpush.msra.mxu0 0.0
    %94 = vmatpush.msra.mxu0 0.0
    %95 = vmatpush.msra.mxu0 0.0
    %96 = vmatpush.msra.mxu0 0.0
    %97 = vmatpush.msra.mxu0 0.0
    %98 = vmatpush.msra.mxu0 0.0
    %99 = vmatpush.msra.mxu0 0.0
    %100 = vmatpush.msra.mxu0 0.0
    %101 = vmatpush.msra.mxu0 0.0
    %102 = vmatpush.msra.mxu0 0.0
    %103 = vmatpush.msra.mxu0 %v81
    %104 = vmatpush.msra.mxu0 %v80
    %105 = vmatmul.f32.gmra.mxu0 %v84
    %v106 = vpop.f32.mrf.mxu0
    %v107 = vadd.f32 0.0, %v106
    %108 = vmatmul.f32.gmra.mxu0 %v87
    %v109 = vpop.f32.mrf.mxu0
    %v110 = vadd.f32 0.0, %v109
    %111 = vdwg.mxu0
    %v113 = vsel %vm82, %v76, 0
    %v116 = vsel %vm82, %v77, 0
    %118 = vmatpush.msra.mxu0 0.0
    %119 = vmatpush.msra.mxu0 0.0
    %120 = vmatpush.msra.mxu0 0.0
    %121 = vmatpush.msra.mxu0 0.0
    %122 = vmatpush.msra.mxu0 0.0
    %123 = vmatpush.msra.mxu0 0.0
    %124 = vmatpush.msra.mxu0 0.0
    %125 = vmatpush.msra.mxu0 0.0
    %126 = vmatpush.msra.mxu0 0.0
    %127 = vmatpush.msra.mxu0 0.0
    %128 = vmatpush.msra.mxu0 0.0
    %129 = vmatpush.msra.mxu0 0.0
    %130 = vmatpush.msra.mxu0 0.0
    %131 = vmatpush.msra.mxu0 0.0
    %132 = vmatpush.msra.mxu0 %v75
    %133 = vmatpush.msra.mxu0 %v74
    %134 = vmatmul.f32.gmra.mxu0 %v113
    %v135 = vpop.f32.mrf.mxu0
    %v136 = vadd.f32 %v107, %v135
    %137 = vmatmul.f32.gmra.mxu0 %v116
    %v138 = vpop.f32.mrf.mxu0
    %v139 = vadd.f32 %v110, %v138
    %140 = vdwg.mxu0
    %v141 = vsub.f32 0.0, %v136
    %v142 = vsub.f32 0.0, %v139
    %v143 = vmul.f32 %v141, 1.442695
    %v144 = vpow.pop %v143
    %v145 = vmul.f32 %v142, 1.442695
    %v146 = vpow.pop %v145
    %v147 = vld [vmem:[%s3] sm:$0xff]
    %v148 = vld [vmem:[%s4] sm:$0xff]
    %150 = vset.pattern.permute.xlu0 0
    %151 = vperm.xlu0 %150, %v148
    %v152 = vpop.permute.xlu0 %151
    %v155 = vsel %vm82, %v147, 0
    %157 = vmatpush.msra.mxu0 0.0
    %158 = vmatpush.msra.mxu0 0.0
    %159 = vmatpush.msra.mxu0 0.0
    %160 = vmatpush.msra.mxu0 0.0
    %161 = vmatpush.msra.mxu0 0.0
    %162 = vmatpush.msra.mxu0 0.0
    %163 = vmatpush.msra.mxu0 0.0
    %164 = vmatpush.msra.mxu0 0.0
    %165 = vmatpush.msra.mxu0 0.0
    %166 = vmatpush.msra.mxu0 0.0
    %167 = vmatpush.msra.mxu0 0.0
    %168 = vmatpush.msra.mxu0 0.0
    %169 = vmatpush.msra.mxu0 0.0
    %170 = vmatpush.msra.mxu0 0.0
    %171 = vmatpush.msra.mxu0 %v146
    %172 = vmatpush.msra.mxu0 %v144
    %173 = vmatmul.f32.gmra.mxu0 %v155
    %v174 = vpop.f32.mrf.mxu0
    %v175 = vadd.f32 %v152, %v174
    %176 = vdwg.mxu0
    %v177 = vmax.f32 %v175, 0.0
    %v178 = vld [vmem:[%s5] sm:$0xf]
    %v179 = vld [vmem:[%s6] sm:$0xf]
    %181 = vset.pattern.permute.xlu0 0
    %182 = vperm.xlu0 %181, %v179
    %v183 = vpop.permute.xlu0 %182
    %vm185 = vcmask 64512
    %v187 = vsel %vm185, %v178, 0
    %189 = vmatpush.msra.mxu0 0.0
    %190 = vmatpush.msra.mxu0 0.0
    %191 = vmatpush.msra.mxu0 0.0
    %192 = vmatpush.msra.mxu0 0.0
    %193 = vmatpush.msra.mxu0 0.0
    %194 = vmatpush.msra.mxu0 0.0
    %195 = vmatpush.msra.mxu0 0.0
    %196 = vmatpush.msra.mxu0 0.0
    %197 = vmatpush.msra.mxu0 0.0
    %198 = vmatpush.msra.mxu0 0.0
    %199 = vmatpush.msra.mxu0 0.0
    %200 = vmatpush.msra.mxu0 0.0
    %201 = vmatpush.msra.mxu0 0.0
    %202 = vmatpush.msra.mxu0 0.0
    %203 = vmatpush.msra.mxu0 0.0
    %204 = vmatpush.msra.mxu0 %v177
    %205 = vmatmul.f32.gmra.mxu0 %v187
    %v206 = vpop.f32.mrf.mxu0
    %v207 = vadd.f32 %v183, %v206
    %208 = vdwg.mxu0
    %209 = vst [vmem:[#allocation8] sm:$0xf] %v207
    // Predicated region
    $region42: #{tpu_custom_call.1} parent=1 // pred_check
      _
    $region43: #{tpu_custom_call.1} parent=1 // pred_check_branch
      %211 = sbr.rel (0) target = $region45
    $region44: #{tpu_custom_call.1} parent=1 // pred_region
      %213 = vsyncadd [#allocation4], 0
      %s215 = sshll.u32 [#allocation8], 4
      %s216 = int_to_ptr.vmem [resolvable:$true] %s215
      %s217 = sshll.u32 %s7, 4
      %s218 = int_to_ptr.hbm [resolvable:$true] %s217
      %220 = dma.vmem_to_hbm [thread:$0]  %s216, 64, %s218, [#allocation4]
    $region45: #{tpu_custom_call.1} parent=1 // pred_fallthru
      _
    // Predicated region
    $region46: #{tpu_custom_call.1} parent=1 // pred_check
      _
    $region47: #{tpu_custom_call.1} parent=1 // pred_check_branch
      %222 = sbr.rel (0) target = $region49
    $region48: #{tpu_custom_call.1} parent=1 // pred_region
      %224 = dma.done [#allocation4], 64
    $region49: #{tpu_custom_call.1} parent=1 // pred_fallthru
      _
    %225 = vsyncpa [#allocation3], 1
    %226 = vsyncpa [#allocation6], 1
    %227 = vsyncpa [#allocation4], 1

</llo_original>
